<compile_context>
chip_gen: v7x
topology: tpu7x:2x2x1
jax: 0.10.0
libtpu: 0.0.40
codegen_flags: <defaults>
</compile_context>

<pallas_src>
import jax
import jax.numpy as jnp
from jax import lax
from jax.experimental import pallas as pl
from jax.experimental.pallas import tpu as pltpu


def _resnet_block_kernel(xt_ref, halo_ref, w_ref, b_ref, o_ref):
    """One (image, row-tile) grid step of fused conv3x3 + residual.

    xt_ref  : (1, TH, W*C)    compute-dtype row tile (lane-dense, NO halo)
    halo_ref: (1, 1, 2, W*C)  [row above tile, row below tile]; zero at image edges
    w_ref   : (3, W*C, W*C)   banded conv weights, one (W*C, W*C) matrix per kh tap
    b_ref   : (1, W*C)        f32 bias tiled across W
    o_ref   : (1, TH, W*C)    output row tile
    """
    th = xt_ref.shape[1]
    xt = xt_ref[0]                                   # (TH, WC) bf16
    hal = halo_ref[0, 0]                             # (2, WC)  bf16

    # 3x3 conv == 3 lane-dense MXU matmuls (one per kh tap) on the unshifted tile.
    # TODO(synk): on v6e/v7x (256-deep MXU) with larger C, fuse the three taps into one
    # K=3*W*C matmul (concat row-shifted tiles along lanes) or pick W*C multiples of 256
    # to fill the MXU; at these sizes the kernel is memory-bound so 3 K=W*C dots are fine.
    y0 = jnp.dot(xt, w_ref[0], preferred_element_type=jnp.float32)
    y1 = jnp.dot(xt, w_ref[1], preferred_element_type=jnp.float32)
    y2 = jnp.dot(xt, w_ref[2], preferred_element_type=jnp.float32)

    # Halo rows only contribute to the first (kh=0) / last (kh=2) output rows of the tile.
    t0 = jnp.dot(hal[0:1], w_ref[0], preferred_element_type=jnp.float32)  # (1, WC)
    b2 = jnp.dot(hal[1:2], w_ref[2], preferred_element_type=jnp.float32)  # (1, WC)

    # Row shifts on the XLU slot (pltpu.roll) + boundary patch: no sublane-unaligned
    # slices anywhere in the kernel (addresses the 0/1/2-offset slice relayout concern).
    rows = lax.broadcasted_iota(jnp.int32, y0.shape, 0)
    c0 = jnp.where(rows == 0, t0, pltpu.roll(y0, 1, axis=0))            # y0 shifted down 1 row
    c2 = jnp.where(rows == th - 1, b2, pltpu.roll(y2, th - 1, axis=0))  # y2 shifted up 1 row

    acc = c0 + y1 + c2 + b_ref[...].astype(jnp.float32)
    # Residual is re-read from the bf16 tile (skip path loses bf16 quantization only).
    o_ref[0] = (acc + xt.astype(jnp.float32)).astype(o_ref.dtype)


def _tpu_vmem_bytes():
    """Per-generation VMEM capacity (128 MiB on v5e/v6e, 64 MiB on v7x); safe fallback."""
    try:
        return int(pltpu.get_tpu_info().vmem_capacity_bytes)
    except Exception:
        return 64 * 1024 * 1024


def _pick_row_tile(H, bytes_per_row, budget_bytes):
    """Whole image if it fits (fewest ~0.35us grid steps), otherwise the largest
    8-aligned divisor of H whose double-buffered in+out blocks fit the budget."""
    if H * bytes_per_row <= budget_bytes:
        return H
    for th in range(H - H % 8, 7, -8):
        if H % th == 0 and th * bytes_per_row <= budget_bytes:
            return th
    raise ValueError(
        "ResNetBlock: no 8-aligned row tile fits the VMEM budget for this shape; "
        "tile channels (split W*C) instead of using the banded-weight formulation.")


def resnet_block_nhwc(x_nhwc, w_oihw, b, *, row_tile=None, compute_dtype=jnp.bfloat16):
    """Fused 3x3 conv (stride 1, pad 1, dilation 1) + residual add, NHWC activations.

    x_nhwc: (N, H, W, C); w_oihw: (Cout, Cin, 3, 3) (PyTorch layout); b: (Cout,).
    Returns (N, H, W, Cout) in x_nhwc.dtype.  Requires Cin == Cout (residual add).
    """
    N, H, W, C = x_nhwc.shape
    Cout, Cin, KH, KW = w_oihw.shape
    assert (KH, KW) == (3, 3), "ResNetBlock uses a 3x3 conv"
    assert Cin == C and Cout == C, "residual add requires in_channel == out_channel"
    out_dtype = x_nhwc.dtype
    WC, WCo = W * C, W * Cout
    cdt = jnp.dtype(compute_dtype)

    # Lane-flattened rows (N, H, W*C).  In NHWC this reshape is free (no data movement);
    # the bf16 cast is the only extra pass and disappears if upstream already runs bf16.
    x_rows = x_nhwc.reshape(N, H, WC).astype(cdt)

    # Per-generation VMEM budget (v7x: 64 MiB physical; v5e/v6e: 128 MiB).
    vmem_cap = min(_tpu_vmem_bytes(), 128 * 1024 * 1024)
    vmem_limit = vmem_cap // 2
    weight_bytes = 2 * (3 * WC * WCo * cdt.itemsize)            # big_w, double-buffered
    bytes_per_row = 2 * (WC * cdt.itemsize + WCo * jnp.dtype(out_dtype).itemsize)
    act_budget = max(vmem_limit // 2 - weight_bytes, 512 * 1024)

    TH = row_tile if row_tile is not None else _pick_row_tile(H, bytes_per_row, act_budget)
    assert H % TH == 0 and (TH % 8 == 0 or TH == H), "row tile must divide H and be 8-aligned"
    n_tiles = H // TH

    # Tiny halo side stream: the single row above / below each row tile (zeroed at the
    # image top/bottom).  This replaces the old jnp.pad + overlapping-(TH+2)-row slab
    # gather: the kernel now reads x once (+ 2 rows per tile) instead of ~3x HBM traffic.
    starts = jnp.arange(n_tiles) * TH
    top_idx, bot_idx = starts - 1, starts + TH
    gather_idx = jnp.stack([jnp.clip(top_idx, 0, H - 1), jnp.clip(bot_idx, 0, H - 1)], axis=1)
    valid = jnp.stack([top_idx >= 0, bot_idx <= H - 1], axis=1).astype(cdt)    # (n_tiles, 2)
    halos = x_rows[:, gather_idx, :] * valid[None, :, :, None]                 # (N, n_tiles, 2, WC)

    # Banded (block-Toeplitz) weights: fold the 3 kw taps and the W zero-padding into one
    # (W*C, W*C) matrix per kh tap, so the conv is 3 lane-dense MXU matmuls.
    # big_w[kh, win*C+ci, wout*C+co] = w[co, ci, kh, kw] with kw = win - wout + 1.
    # TODO(synk): beyond roughly W*C ~ 512-1024 the banded matrix's VMEM/FLOP inflation
    # dominates; switch to a channel-contraction (contract Cin only, kw taps via roll).
    w_hwio = jnp.transpose(w_oihw, (2, 3, 1, 0)).astype(jnp.float32)    # (3, 3, Cin, Cout)
    kw_ar = jnp.arange(3)[:, None, None]
    win_ar = jnp.arange(W)[None, :, None]
    wout_ar = jnp.arange(W)[None, None, :]
    band = (win_ar == wout_ar + kw_ar - 1).astype(jnp.float32)          # (3, W, W)
    big_w = jnp.einsum("kaw,hkio->haiwo", band, w_hwio).reshape(3, WC, WCo).astype(cdt)
    b_row = jnp.tile(b.astype(jnp.float32), (W,)).reshape(1, WCo)       # bias stays f32

    out_rows = pl.pallas_call(
        _resnet_block_kernel,
        out_shape=jax.ShapeDtypeStruct((N, H, WCo), out_dtype),
        grid_spec=pltpu.PrefetchScalarGridSpec(
            num_scalar_prefetch=0,
            grid=(N, n_tiles),
            in_specs=[
                # TODO(synk): on v5e (lower HBM BW) consider pipeline_mode=pl.Buffered(3)
                # for this stream once per-step compute is this small.
                pl.BlockSpec((1, TH, WC), lambda n, h: (n, h, 0)),
                pl.BlockSpec((1, 1, 2, WC), lambda n, h: (n, h, 0, 0)),
                # TODO(synk): for large W*C, preload the grid-invariant big_w into VMEM
                # scratch (or pipeline_mode=pl.Buffered(1)) so it is not double-buffered;
                # matters most on v7x's 64 MiB VMEM.
                pl.BlockSpec((3, WC, WCo), lambda n, h: (0, 0, 0)),
                pl.BlockSpec((1, WCo), lambda n, h: (0, 0)),
            ],
            out_specs=pl.BlockSpec((1, TH, WCo), lambda n, h: (n, h, 0)),
        ),
        compiler_params=pltpu.CompilerParams(
            dimension_semantics=("parallel", "parallel"),
            vmem_limit_bytes=vmem_limit,
        ),
    )(x_rows, halos, big_w, b_row)

    return out_rows.reshape(N, H, W, Cout)     # free reshape; stays NHWC end-to-end


def resnet_block_nchw(x_nchw, w_oihw, b, **kwargs):
    """PyTorch-layout (NCHW) drop-in adapter.
    TODO(synk): in an NHWC end-to-end pipeline these two transposes (each a full HBM
    round trip) disappear; call resnet_block_nhwc directly."""
    x_nhwc = jnp.transpose(x_nchw, (0, 2, 3, 1))
    out = resnet_block_nhwc(x_nhwc, w_oihw, b, **kwargs)
    return jnp.transpose(out, (0, 3, 1, 2))


def _reference_nchw(x_nchw, w_oihw, b):
    """Plain-JAX reference with the same semantics as the PyTorch module."""
    conv = lax.conv_general_dilated(
        x_nchw, w_oihw, window_strides=(1, 1), padding=((1, 1), (1, 1)),
        rhs_dilation=(1, 1), dimension_numbers=("NCHW", "OIHW", "NCHW"))
    return x_nchw + conv + b.reshape(1, -1, 1, 1)


if __name__ == "__main__":
    # Small shapes consistent with the module: batch=2, channels=8, spatial=16.
    # (W*C = 128 -> exactly one lane width inside the kernel.)
    N, C, H, W = 2, 8, 16, 16
    key = jax.random.PRNGKey(0)
    kx, kw_key, kb_key = jax.random.split(key, 3)

    x_nchw = jax.random.normal(kx, (N, C, H, W), dtype=jnp.float32)
    fan_in = C * 3 * 3
    bound = 1.0 / (fan_in ** 0.5)
    w = jax.random.uniform(kw_key, (C, C, 3, 3), jnp.float32, -bound, bound)
    b = jax.random.uniform(kb_key, (C,), jnp.float32, -bound, bound)

    # bf16-aware reference: quantize x/w to bf16 exactly as the kernel does, accumulate
    # in f32 -> remaining differences are accumulation-order only (tight tolerance).
    xq = x_nchw.astype(jnp.bfloat16).astype(jnp.float32)
    wq = w.astype(jnp.bfloat16).astype(jnp.float32)
    ref_nchw = jax.block_until_ready(_reference_nchw(xq, wq, b))

    # 1) PyTorch-layout adapter, default row tile (whole image -> grid = (N, 1)).
    out1 = jax.block_until_ready(resnet_block_nchw(x_nchw, w, b))
    assert out1.shape == (N, C, H, W)
    assert jnp.allclose(out1, ref_nchw, atol=3e-3, rtol=3e-3), "mismatch (whole-image tile)"

    # 2) NHWC-native path with H tiling (row_tile=8) to exercise the halo rows.
    x_nhwc = jnp.transpose(x_nchw, (0, 2, 3, 1))
    ref_nhwc = jnp.transpose(ref_nchw, (0, 2, 3, 1))
    out2 = jax.block_until_ready(resnet_block_nhwc(x_nhwc, w, b, row_tile=8))
    assert out2.shape == (N, H, W, C)
    assert jnp.allclose(out2, ref_nhwc, atol=3e-3, rtol=3e-3), "mismatch (tiled + halo)"

    print("KERNEL_OK")
</pallas_src>

<mosaic_0001>
module attributes {stable_mosaic.version = 11 : i64} {
  func.func @_resnet_block_kernel(%arg0: i32, %arg1: i32, %arg2: memref<1x16x128xbf16, #tpu.memory_space<vmem>>, %arg3: memref<1x1x2x128xbf16, #tpu.memory_space<vmem>>, %arg4: memref<3x128x128xbf16, #tpu.memory_space<vmem>>, %arg5: memref<1x128xf32, #tpu.memory_space<vmem>>, %arg6: memref<1x16x128xf32, #tpu.memory_space<vmem>>) attributes {dimension_semantics = [#tpu.dimension_semantics<parallel>, #tpu.dimension_semantics<parallel>], iteration_bounds = array<i64: 2, 1>, scalar_prefetch = 0 : i64, scratch_operands = 0 : i64, tpu.core_type = #tpu.core_type<tc>, window_params = [{transform_indices = @transform_0, window_bounds = array<i64: 1, 16, 128>}, {transform_indices = @transform_1, window_bounds = array<i64: 1, 1, 2, 128>}, {pipeline_mode = #tpu.pipeline_mode<synchronous>, transform_indices = @transform_2, window_bounds = array<i64: 3, 128, 128>}, {pipeline_mode = #tpu.pipeline_mode<synchronous>, transform_indices = @transform_3, window_bounds = array<i64: 1, 128>}, {transform_indices = @transform_4, window_bounds = array<i64: 1, 16, 128>}]} {
    %c0 = arith.constant 0 : index
    %c0_0 = arith.constant 0 : index
    %c0_1 = arith.constant 0 : index
    %0 = vector.load %arg2[%c0, %c0_0, %c0_1] : memref<1x16x128xbf16, #tpu.memory_space<vmem>>, vector<1x16x128xbf16>
    %1 = vector.shape_cast %0 : vector<1x16x128xbf16> to vector<16x128xbf16>
    %c0_2 = arith.constant 0 : index
    %c0_3 = arith.constant 0 : index
    %c0_4 = arith.constant 0 : index
    %c0_5 = arith.constant 0 : index
    %2 = vector.load %arg3[%c0_2, %c0_3, %c0_4, %c0_5] : memref<1x1x2x128xbf16, #tpu.memory_space<vmem>>, vector<1x1x2x128xbf16>
    %3 = vector.shape_cast %2 : vector<1x1x2x128xbf16> to vector<2x128xbf16>
    %c0_6 = arith.constant 0 : index
    %c0_7 = arith.constant 0 : index
    %c0_8 = arith.constant 0 : index
    %4 = vector.load %arg4[%c0_6, %c0_7, %c0_8] : memref<3x128x128xbf16, #tpu.memory_space<vmem>>, vector<1x128x128xbf16>
    %5 = vector.shape_cast %4 : vector<1x128x128xbf16> to vector<128x128xbf16>
    %cst = arith.constant dense<0.000000e+00> : vector<16x128xf32>
    %6 = tpu.matmul %1, %5, %cst {dimension_numbers = #tpu.dot_dimension_numbers<[1], [0], [0], [1], [0, 0, 1, 1], [], []>} : vector<16x128xbf16>, vector<128x128xbf16>, vector<16x128xf32> -> vector<16x128xf32>
    %c1 = arith.constant 1 : index
    %c0_9 = arith.constant 0 : index
    %c0_10 = arith.constant 0 : index
    %7 = vector.load %arg4[%c1, %c0_9, %c0_10] : memref<3x128x128xbf16, #tpu.memory_space<vmem>>, vector<1x128x128xbf16>
    %8 = vector.shape_cast %7 : vector<1x128x128xbf16> to vector<128x128xbf16>
    %cst_11 = arith.constant dense<0.000000e+00> : vector<16x128xf32>
    %9 = tpu.matmul %1, %8, %cst_11 {dimension_numbers = #tpu.dot_dimension_numbers<[1], [0], [0], [1], [0, 0, 1, 1], [], []>} : vector<16x128xbf16>, vector<128x128xbf16>, vector<16x128xf32> -> vector<16x128xf32>
    %c2 = arith.constant 2 : index
    %c0_12 = arith.constant 0 : index
    %c0_13 = arith.constant 0 : index
    %10 = vector.load %arg4[%c2, %c0_12, %c0_13] : memref<3x128x128xbf16, #tpu.memory_space<vmem>>, vector<1x128x128xbf16>
    %11 = vector.shape_cast %10 : vector<1x128x128xbf16> to vector<128x128xbf16>
    %cst_14 = arith.constant dense<0.000000e+00> : vector<16x128xf32>
    %12 = tpu.matmul %1, %11, %cst_14 {dimension_numbers = #tpu.dot_dimension_numbers<[1], [0], [0], [1], [0, 0, 1, 1], [], []>} : vector<16x128xbf16>, vector<128x128xbf16>, vector<16x128xf32> -> vector<16x128xf32>
    %13 = vector.extract_strided_slice %3 {offsets = [0, 0], sizes = [1, 128], strides = [1, 1]} : vector<2x128xbf16> to vector<1x128xbf16>
    %c0_15 = arith.constant 0 : index
    %c0_16 = arith.constant 0 : index
    %c0_17 = arith.constant 0 : index
    %14 = vector.load %arg4[%c0_15, %c0_16, %c0_17] : memref<3x128x128xbf16, #tpu.memory_space<vmem>>, vector<1x128x128xbf16>
    %15 = vector.shape_cast %14 : vector<1x128x128xbf16> to vector<128x128xbf16>
    %cst_18 = arith.constant dense<0.000000e+00> : vector<1x128xf32>
    %16 = tpu.matmul %13, %15, %cst_18 {dimension_numbers = #tpu.dot_dimension_numbers<[1], [0], [0], [1], [0, 0, 1, 1], [], []>} : vector<1x128xbf16>, vector<128x128xbf16>, vector<1x128xf32> -> vector<1x128xf32>
    %17 = vector.extract_strided_slice %3 {offsets = [1, 0], sizes = [1, 128], strides = [1, 1]} : vector<2x128xbf16> to vector<1x128xbf16>
    %c2_19 = arith.constant 2 : index
    %c0_20 = arith.constant 0 : index
    %c0_21 = arith.constant 0 : index
    %18 = vector.load %arg4[%c2_19, %c0_20, %c0_21] : memref<3x128x128xbf16, #tpu.memory_space<vmem>>, vector<1x128x128xbf16>
    %19 = vector.shape_cast %18 : vector<1x128x128xbf16> to vector<128x128xbf16>
    %cst_22 = arith.constant dense<0.000000e+00> : vector<1x128xf32>
    %20 = tpu.matmul %17, %19, %cst_22 {dimension_numbers = #tpu.dot_dimension_numbers<[1], [0], [0], [1], [0, 0, 1, 1], [], []>} : vector<1x128xbf16>, vector<128x128xbf16>, vector<1x128xf32> -> vector<1x128xf32>
    %21 = tpu.iota {dimensions = array<i32: 0>} : vector<16x128xi32>
    %c0_i32 = arith.constant 0 : i32
    %22 = vector.broadcast %c0_i32 : i32 to vector<16x128xi32>
    %23 = arith.cmpi eq, %21, %22 : vector<16x128xi32>
    %c1_i32 = arith.constant 1 : i32
    %24 = tpu.dynamic_rotate %6 by %c1_i32 dim 0 : vector<16x128xf32>, i32 -> vector<16x128xf32>
    %25 = vector.shape_cast %16 : vector<1x128xf32> to vector<1x128xf32>
    %26 = vector.broadcast %25 : vector<1x128xf32> to vector<16x128xf32>
    %27 = arith.select %23, %26, %24 : vector<16x128xi1>, vector<16x128xf32>
    %c15_i32 = arith.constant 15 : i32
    %28 = vector.broadcast %c15_i32 : i32 to vector<16x128xi32>
    %29 = arith.cmpi eq, %21, %28 : vector<16x128xi32>
    %c15_i32_23 = arith.constant 15 : i32
    %30 = tpu.dynamic_rotate %12 by %c15_i32_23 dim 0 : vector<16x128xf32>, i32 -> vector<16x128xf32>
    %31 = vector.shape_cast %20 : vector<1x128xf32> to vector<1x128xf32>
    %32 = vector.broadcast %31 : vector<1x128xf32> to vector<16x128xf32>
    %33 = arith.select %29, %32, %30 : vector<16x128xi1>, vector<16x128xf32>
    %34 = arith.addf %27, %9 : vector<16x128xf32>
    %35 = arith.addf %34, %33 : vector<16x128xf32>
    %c0_24 = arith.constant 0 : index
    %c0_25 = arith.constant 0 : index
    %36 = vector.load %arg5[%c0_24, %c0_25] : memref<1x128xf32, #tpu.memory_space<vmem>>, vector<1x128xf32>
    %37 = vector.broadcast %36 : vector<1x128xf32> to vector<16x128xf32>
    %38 = arith.addf %35, %37 : vector<16x128xf32>
    %39 = arith.extf %1 : vector<16x128xbf16> to vector<16x128xf32>
    %40 = arith.addf %38, %39 : vector<16x128xf32>
    %c0_26 = arith.constant 0 : index
    %c0_27 = arith.constant 0 : index
    %c0_28 = arith.constant 0 : index
    %41 = vector.load %arg6[%c0_26, %c0_27, %c0_28] : memref<1x16x128xf32, #tpu.memory_space<vmem>>, vector<1x16x128xf32>
    %42 = vector.shape_cast %41 : vector<1x16x128xf32> to vector<16x128xf32>
    %43 = vector.shape_cast %40 : vector<16x128xf32> to vector<1x16x128xf32>
    tpu.vector_store %arg6[%c0_26, %c0_27, %c0_28], %43 {strides = array<i32>} : memref<1x16x128xf32, #tpu.memory_space<vmem>>, vector<1x16x128xf32>,
    return
  }
  func.func @transform_0(%arg0: i32, %arg1: i32) -> (i32, i32, i32) {
    %c0_i32 = arith.constant 0 : i32
    %c0_i32_0 = arith.constant 0 : i32
    return %arg0, %arg1, %c0_i32 : i32, i32, i32
  }
  func.func @transform_1(%arg0: i32, %arg1: i32) -> (i32, i32, i32, i32) {
    %c0_i32 = arith.constant 0 : i32
    %c0_i32_0 = arith.constant 0 : i32
    %c0_i32_1 = arith.constant 0 : i32
    return %arg0, %arg1, %c0_i32, %c0_i32_0 : i32, i32, i32, i32
  }
  func.func @transform_2(%arg0: i32, %arg1: i32) -> (i32, i32, i32) {
    %c0_i32 = arith.constant 0 : i32
    %c0_i32_0 = arith.constant 0 : i32
    %c0_i32_1 = arith.constant 0 : i32
    %c0_i32_2 = arith.constant 0 : i32
    return %c0_i32, %c0_i32_0, %c0_i32_1 : i32, i32, i32
  }
  func.func @transform_3(%arg0: i32, %arg1: i32) -> (i32, i32) {
    %c0_i32 = arith.constant 0 : i32
    %c0_i32_0 = arith.constant 0 : i32
    %c0_i32_1 = arith.constant 0 : i32
    return %c0_i32, %c0_i32_0 : i32, i32
  }
  func.func @transform_4(%arg0: i32, %arg1: i32) -> (i32, i32, i32) {
    %c0_i32 = arith.constant 0 : i32
    %c0_i32_0 = arith.constant 0 : i32
    return %arg0, %arg1, %c0_i32 : i32, i32, i32
  }
}

</mosaic_0001>

<llo_original>
// kernel: tpu_custom_call.1
$region0: #{tpu_custom_call.1}
  #allocation0 [shape = 'u32[]', space=smem, size = 0x4, offset = 0x4, fixed_abs, tag = 'smem constant byte address 0x4 - core index']
  #allocation1 [shape = 'u32[144,128]{1,0:T(1,128)}', space=vmem, size = 0x12000, scoped, tag = 'internal scratch']
  %s0 = inlined_call_operand.hbm [shape: bf16[2,16,128], index: 0, kind: input, shape index: {}]
  %s1 = inlined_call_operand.vmem [shape: bf16[2,1,2,128], index: 1, kind: input, shape index: {}]
  %s2 = inlined_call_operand.hbm [shape: bf16[3,128,128], index: 2, kind: input, shape index: {}]
  %s3 = inlined_call_operand.vmem [shape: f32[1,128], index: 3, kind: input, shape index: {}]
  %s4 = inlined_call_operand.hbm [shape: f32[2,16,128], index: 4, kind: output, shape index: {}]
  %s5 = sld [smem:[#allocation0]]
  $region57: #{tpu_custom_call.1} parent=0
    _
  %s7 = ssub.s32 1, %s5
  %s8 = scalar_select 0, %s7, %s5
  $region1: #{tpu_custom_call.1} parent=0
    #allocation2 [shape = 'u8[8192]{0}', space=vmem, size = 0x2000, scoped, tag = 'input window, operand 0']
    #allocation3 [shape = 's32[2]{0}', space=sflag, size = 0x8, scoped, tag = 'scoped memory for tpu_custom_call.1']
    #allocation4 [shape = 's32[2]{0}', space=sflag, size = 0x8, scoped, tag = 'scoped memory for tpu_custom_call.1']
    #allocation5 [shape = 'u8[98304]{0}', space=vmem, size = 0x18000, scoped, tag = 'input window, operand 2, single buffered']
    #allocation6 [shape = 's32[1]{0}', space=sflag, size = 0x4, scoped, tag = 'scoped memory for tpu_custom_call.1']
    #allocation7 [shape = 'u8[16384]{0}', space=vmem, size = 0x4000, scoped, tag = 'output window, operand 0']
    %9 = vsyncpa [#allocation3], 0
    %s10 = scalar_lea.sflag [#allocation3], 1
    %11 = vsyncpa %s10, 0
    %12 = vsyncpa [#allocation6], 0
    %13 = vsyncpa [#allocation4], 0
    %s14 = scalar_lea.sflag [#allocation4], 1
    %15 = vsyncpa %s14, 0
    loop: start=0, step=1, limit=4
    $region2: #{tpu_custom_call.1} parent=1 // loop_pre_header
      _
    $region3: #{tpu_custom_call.1} parent=1 // loop_header
      %s17 = sphi 0, %s21
      %p18 = scmp.ge.s32.totalorder %s17, 4
      %s24 = sphi 0, %s36
      %s25 = sphi 0, %s32
      %s26 = sphi 0, %s24
      %s27 = sphi 0, %s25
      %s28 = sphi 0, %s26
      %s29 = sphi 0, %s27
      %s41 = sphi 0, %s43
      %s44 = sphi 0, %s41
      %s45 = sphi 0, %s44
      %s61 = sphi 0, %s45
      %s69 = sphi 0, %s71
      %s72 = sphi 0, %s69
      %s73 = sphi 0, %s72
      %s89 = sphi 0, %s73
      %s93 = sphi 0, %s93
      %s95 = sphi 0, %s93
      %s96 = sphi 0, %s95
      %s110 = sphi 0, %s96
      %s114 = sphi 0, %s114
      %s116 = sphi 0, %s114
      %s117 = sphi 0, %s116
      %s131 = sphi 0, %s117
      %s139 = sphi 0, %s141
      %s142 = sphi 0, %s139
      %s143 = sphi 0, %s142
      %s159 = sphi 0, %s143
    $region4: #{tpu_custom_call.1} parent=1 // loop_header_branch
      %20 = sbr.rel (%p18) target = $region8
    $region5: #{tpu_custom_call.1} parent=1 // loop_body
      %s22 = ssub.s32 %s17, 1
      %s23 = ssub.s32 %s17, 2
      %s30 = sadd.s32 1, %s25
      %p31 = scmp.ge.s32.totalorder %s30, 1
      %s32 = scalar_select %p31, 0, %s30
      %s33 = sadd.s32 1, %s24
      %s34 = scalar_select %p31, %s33, %s24
      %p35 = scmp.ge.s32.totalorder %s34, 2
      %s36 = scalar_select %p35, 0, %s34
      %s37 = ssub.s32 %s24, %s36
      %s38 = ssub.s32 %s25, %s32
      %s39 = sor.u32 %s37, %s38
      %p40 = scmp.eq.s32.totalorder %s39, 0
      %s42 = sadd.s32 %s41, 1
      %s43 = scalar_select %p40, %s41, %s42
      %p46 = pneg %p40
      %p47 = scmp.eq.s32.totalorder %s17, 1
      %p48 = por %p46, %p47
      %p49 = scmp.ne.s32.totalorder %s41, %s44
      %p50 = scmp.eq.s32.totalorder %s17, 0
      %p51 = por %p49, %p50
      %p52 = scmp.ne.s32.totalorder %s41, %s44
      %p53 = scmp.eq.s32.totalorder %s22, 1
      %p54 = por %p52, %p53
      %p55 = scmp.ne.s32.totalorder %s44, %s45
      %p56 = scmp.eq.s32.totalorder %s22, 0
      %p57 = por %p55, %p56
      %p58 = scmp.ne.s32.totalorder %s44, %s45
      %p59 = scmp.eq.s32.totalorder %s23, 1
      %p60 = por %p58, %p59
      %p62 = scmp.ne.s32.totalorder %s45, %s61
      %p63 = scmp.eq.s32.totalorder %s23, 0
      %p64 = por %p62, %p63
      %s65 = ssub.s32 %s24, %s36
      %s66 = ssub.s32 %s25, %s32
      %s67 = sor.u32 %s65, %s66
      %p68 = scmp.eq.s32.totalorder %s67, 0
      %s70 = sadd.s32 %s69, 1
      %s71 = scalar_select %p68, %s69, %s70
      %p74 = pneg %p68
      %p75 = scmp.eq.s32.totalorder %s17, 1
      %p76 = por %p74, %p75
      %p77 = scmp.ne.s32.totalorder %s69, %s72
      %p78 = scmp.eq.s32.totalorder %s17, 0
      %p79 = por %p77, %p78
      %p80 = scmp.ne.s32.totalorder %s69, %s72
      %p81 = scmp.eq.s32.totalorder %s22, 1
      %p82 = por %p80, %p81
      %p83 = scmp.ne.s32.totalorder %s72, %s73
      %p84 = scmp.eq.s32.totalorder %s22, 0
      %p85 = por %p83, %p84
      %p86 = scmp.ne.s32.totalorder %s72, %s73
      %p87 = scmp.eq.s32.totalorder %s23, 1
      %p88 = por %p86, %p87
      %p90 = scmp.ne.s32.totalorder %s73, %s89
      %p91 = scmp.eq.s32.totalorder %s23, 0
      %p92 = por %p90, %p91
      %s94 = sadd.s32 %s93, 1
      %p97 = scmp.eq.s32.totalorder %s17, 1
      %p98 = scmp.ne.s32.totalorder %s93, %s95
      %p99 = scmp.eq.s32.totalorder %s17, 0
      %p100 = por %p98, %p99
      %p101 = scmp.ne.s32.totalorder %s93, %s95
      %p102 = scmp.eq.s32.totalorder %s22, 1
      %p103 = por %p101, %p102
      %p104 = scmp.ne.s32.totalorder %s95, %s96
      %p105 = scmp.eq.s32.totalorder %s22, 0
      %p106 = por %p104, %p105
      %p107 = scmp.ne.s32.totalorder %s95, %s96
      %p108 = scmp.eq.s32.totalorder %s23, 1
      %p109 = por %p107, %p108
      %p111 = scmp.ne.s32.totalorder %s96, %s110
      %p112 = scmp.eq.s32.totalorder %s23, 0
      %p113 = por %p111, %p112
      %s115 = sadd.s32 %s114, 1
      %p118 = scmp.eq.s32.totalorder %s17, 1
      %p119 = scmp.ne.s32.totalorder %s114, %s116
      %p120 = scmp.eq.s32.totalorder %s17, 0
      %p121 = por %p119, %p120
      %p122 = scmp.ne.s32.totalorder %s114, %s116
      %p123 = scmp.eq.s32.totalorder %s22, 1
      %p124 = por %p122, %p123
      %p125 = scmp.ne.s32.totalorder %s116, %s117
      %p126 = scmp.eq.s32.totalorder %s22, 0
      %p127 = por %p125, %p126
      %p128 = scmp.ne.s32.totalorder %s116, %s117
      %p129 = scmp.eq.s32.totalorder %s23, 1
      %p130 = por %p128, %p129
      %p132 = scmp.ne.s32.totalorder %s117, %s131
      %p133 = scmp.eq.s32.totalorder %s23, 0
      %p134 = por %p132, %p133
      %s135 = ssub.s32 %s24, %s36
      %s136 = ssub.s32 %s25, %s32
      %s137 = sor.u32 %s135, %s136
      %p138 = scmp.eq.s32.totalorder %s137, 0
      %s140 = sadd.s32 %s139, 1
      %s141 = scalar_select %p138, %s139, %s140
      %p144 = pneg %p138
      %p145 = scmp.eq.s32.totalorder %s17, 1
      %p146 = por %p144, %p145
      %p147 = scmp.ne.s32.totalorder %s139, %s142
      %p148 = scmp.eq.s32.totalorder %s17, 0
      %p149 = por %p147, %p148
      %p150 = scmp.ne.s32.totalorder %s139, %s142
      %p151 = scmp.eq.s32.totalorder %s22, 1
      %p152 = por %p150, %p151
      %p153 = scmp.ne.s32.totalorder %s142, %s143
      %p154 = scmp.eq.s32.totalorder %s22, 0
      %p155 = por %p153, %p154
      %p156 = scmp.ne.s32.totalorder %s142, %s143
      %p157 = scmp.eq.s32.totalorder %s23, 1
      %p158 = por %p156, %p157
      %p160 = scmp.ne.s32.totalorder %s143, %s159
      %p161 = scmp.eq.s32.totalorder %s23, 0
      %p162 = por %p160, %p161
      %p163 = scmp.le.s32.totalorder 1, %s17
      %p164 = scmp.lt.s32.totalorder %s17, 3
      %p165 = pnand %p163, %p164
      %p166 = pneg %p165
      // Predicated region
      $region9: #{tpu_custom_call.1} parent=5 // pred_check
        _
      $region10: #{tpu_custom_call.1} parent=5 // pred_check_branch
        %168 = sbr.rel (%p165) target = $region12
      $region11: #{tpu_custom_call.1} parent=5 // pred_region
        %s169 = ssub.s32 %s17, 1
        // Predicated region
        $region13: #{tpu_custom_call.1} parent=11 // pred_check
          %p170 = pneg %p106
        $region14: #{tpu_custom_call.1} parent=11 // pred_check_branch
          %172 = sbr.rel (%p170) target = $region16
        $region15: #{tpu_custom_call.1} parent=11 // pred_region
          %s174 = ssub.s32 3072, 3072
          %175 = vsyncadd [#allocation6], %s174
          %s176 = sshll.u32 [#allocation5], 4
          %s177 = int_to_ptr.vmem [resolvable:$true] %s176
          %182 = dma.hbm_to_vmem [thread:$0]  %s2, 3072, %s177, [#allocation6], 64, 64, 4
        $region16: #{tpu_custom_call.1} parent=11 // pred_fallthru
          _
        // Predicated region
        $region17: #{tpu_custom_call.1} parent=11 // pred_check
          %p183 = pneg %p127
        $region18: #{tpu_custom_call.1} parent=11 // pred_check_branch
          %185 = sbr.rel (%p183) target = $region20
        $region19: #{tpu_custom_call.1} parent=11 // pred_region
          _
        $region20: #{tpu_custom_call.1} parent=11 // pred_fallthru
          _
      $region12: #{tpu_custom_call.1} parent=5 // pred_fallthru
        _
      %p186 = scmp.lt.s32.totalorder %s17, 2
      // Predicated region
      $region21: #{tpu_custom_call.1} parent=5 // pred_check
        %p187 = pneg %p186
      $region22: #{tpu_custom_call.1} parent=5 // pred_check_branch
        %189 = sbr.rel (%p187) target = $region24
      $region23: #{tpu_custom_call.1} parent=5 // pred_region
        // Predicated region
        $region25: #{tpu_custom_call.1} parent=23 // pred_check
          %p190 = pneg %p51
        $region26: #{tpu_custom_call.1} parent=23 // pred_check_branch
          %192 = sbr.rel (%p190) target = $region28
        $region27: #{tpu_custom_call.1} parent=23 // pred_region
          %s193 = sand.u32 %s41, 1
          %s194 = scalar_lea.sflag [#allocation3], %s193
          %s195 = sand.u32 %s41, 1
          %s196 = smul.addr %s195, 8
          %s197 = scalar_lea.vmem [#allocation2], %s196
          %s198 = smul.u32 2, %s25
          %s200 = ssub.s32 128, 128
          %201 = vsyncadd %s194, %s200
          %s202 = smul.addr %s24, 2
          %s203 = sadd.s32 %s198, %s202
          %s204 = smul.addr %s203, 64
          %s205 = scalar_lea.hbm %s0, %s204
          %s206 = sshll.u32 %s197, 4
          %s207 = int_to_ptr.vmem [resolvable:$true] %s206
          %212 = dma.hbm_to_vmem [thread:$0]  %s205, 128, %s207, %s194, 64, 64, 4
        $region28: #{tpu_custom_call.1} parent=23 // pred_fallthru
          _
        // Predicated region
        $region29: #{tpu_custom_call.1} parent=23 // pred_check
          %p213 = pneg %p79
        $region30: #{tpu_custom_call.1} parent=23 // pred_check_branch
          %215 = sbr.rel (%p213) target = $region32
        $region31: #{tpu_custom_call.1} parent=23 // pred_region
          %p216 = scmp.lt.s32.totalorder %s24, 1
          %s217 = scalar_select %p216, %s24, 1
          %p218 = scmp.lt.s32.totalorder %s25, 0
          %s219 = scalar_select %p218, %s25, 0
          %s220 = sadd.s32 %s219, %s217
          %s221 = scalar_lea.vmem %s1, %s220
        $region32: #{tpu_custom_call.1} parent=23 // pred_fallthru
          _
      $region24: #{tpu_custom_call.1} parent=5 // pred_fallthru
        _
      %p222 = scmp.le.s32.totalorder 1, %s17
      %p223 = scmp.lt.s32.totalorder %s17, 3
      %p224 = pnand %p222, %p223
      %p225 = pneg %p224
      // Predicated region
      $region33: #{tpu_custom_call.1} parent=5 // pred_check
        _
      $region34: #{tpu_custom_call.1} parent=5 // pred_check_branch
        %227 = sbr.rel (%p224) target = $region36
      $region35: #{tpu_custom_call.1} parent=5 // pred_region
        %s228 = ssub.s32 %s17, 1
        %s229 = sand.u32 %s44, 1
        %s230 = scalar_lea.sflag [#allocation3], %s229
        %s231 = sand.u32 %s44, 1
        %s232 = smul.addr %s231, 8
        %s233 = scalar_lea.vmem [#allocation2], %s232
        // Predicated region
        $region37: #{tpu_custom_call.1} parent=35 // pred_check
          %p234 = pneg %p57
        $region38: #{tpu_custom_call.1} parent=35 // pred_check_branch
          %236 = sbr.rel (%p234) target = $region40
        $region39: #{tpu_custom_call.1} parent=35 // pred_region
          %237 = dma.done %s230, 128
        $region40: #{tpu_custom_call.1} parent=35 // pred_fallthru
          _
        // Predicated region
        $region41: #{tpu_custom_call.1} parent=35 // pred_check
          %p238 = pneg %p106
        $region42: #{tpu_custom_call.1} parent=35 // pred_check_branch
          %240 = sbr.rel (%p238) target = $region44
        $region43: #{tpu_custom_call.1} parent=35 // pred_region
          %241 = dma.done [#allocation6], 3072
        $region44: #{tpu_custom_call.1} parent=35 // pred_fallthru
          _
        %s242 = sand.u32 %s44, 1
        %s243 = scalar_lea.sflag [#allocation3], %s242
        %s244 = sand.u32 %s44, 1
        %s245 = smul.addr %s244, 8
        %s246 = scalar_lea.vmem [#allocation2], %s245
        %p247 = pneg %p57
        %p248 = pneg %p54
        %p249 = scmp.lt.s32.totalorder %s26, 1
        %s250 = scalar_select %p249, %s26, 1
        %p251 = scmp.lt.s32.totalorder %s27, 0
        %s252 = scalar_select %p251, %s27, 0
        %s253 = sadd.s32 %s252, %s250
        %s254 = scalar_lea.vmem %s1, %s253
        %p255 = pneg %p85
        %p256 = pneg %p82
        %p257 = pneg %p106
        %p258 = pneg %p103
        %p259 = pneg %p127
        %p260 = pneg %p124
        %p261 = pneg %p155
        %p262 = pneg %p152
        %s263 = sand.u32 %s142, 1
        %s264 = scalar_lea.sflag [#allocation4], %s263
        %s265 = sand.u32 %s142, 1
        %s266 = smul.addr %s265, 16
        %s267 = scalar_lea.vmem [#allocation7], %s266
        %s268 = smul.u32 2, %s27
        %p269 = scmp.lt.s32.totalorder %s26, 1
        %s270 = scalar_select %p269, %s26, 1
        %p271 = scmp.lt.s32.totalorder %s27, 0
        %s272 = scalar_select %p271, %s27, 0
        %s273 = sadd.s32 %s272, %s270
        %s274 = scalar_lea.vmem %s1, %s273
        %s275 = smul.u32 2, %s27
        %v277 = vld [vmem:[%s233] sm:$0xf]
        %v278 = vld [vmem:[%s233 + $0x4] sm:$0xf]
        %v279 = vld [vmem:[%s274] sm:$0x1]
        %v280 = vld [vmem:[#allocation5] sm:$0xf]
        %v281 = vld [vmem:[#allocation5 + $0x4] sm:$0xf]
        %v282 = vld [vmem:[#allocation5 + $0x8] sm:$0xf]
        %v283 = vld [vmem:[#allocation5 + $0xc] sm:$0xf]
        %v284 = vld [vmem:[#allocation5 + $0x10] sm:$0xf]
        %v285 = vld [vmem:[#allocation5 + $0x14] sm:$0xf]
        %v286 = vld [vmem:[#allocation5 + $0x18] sm:$0xf]
        %v287 = vld [vmem:[#allocation5 + $0x1c] sm:$0xf]
        %v288 = vld [vmem:[#allocation5 + $0x20] sm:$0xf]
        %v289 = vld [vmem:[#allocation5 + $0x24] sm:$0xf]
        %v290 = vld [vmem:[#allocation5 + $0x28] sm:$0xf]
        %v291 = vld [vmem:[#allocation5 + $0x2c] sm:$0xf]
        %v292 = vld [vmem:[#allocation5 + $0x30] sm:$0xf]
        %v293 = vld [vmem:[#allocation5 + $0x34] sm:$0xf]
        %v294 = vld [vmem:[#allocation5 + $0x38] sm:$0xf]
        %v295 = vld [vmem:[#allocation5 + $0x3c] sm:$0xf]
        %v298 = vunpack.c.l.b16 %v277
        %v299 = vunpack.c.l.b16 %v278
        %v300 = vpack.c.b16 %v299, %v298
        %v318 = vunpack.c.l.b16 %v280
        %v319 = vunpack.c.l.b16 %v281
        %v320 = vunpack.c.l.b16 %v282
        %v321 = vunpack.c.l.b16 %v283
        %v322 = vunpack.c.l.b16 %v284
        %v323 = vunpack.c.l.b16 %v285
        %v324 = vunpack.c.l.b16 %v286
        %v325 = vunpack.c.l.b16 %v287
        %v326 = vunpack.c.l.b16 %v288
        %v327 = vunpack.c.l.b16 %v289
        %v328 = vunpack.c.l.b16 %v290
        %v329 = vunpack.c.l.b16 %v291
        %v330 = vunpack.c.l.b16 %v292
        %v331 = vunpack.c.l.b16 %v293
        %v332 = vunpack.c.l.b16 %v294
        %v333 = vunpack.c.l.b16 %v295
        %v334 = vpack.c.b16 %v319, %v318
        %v335 = vpack.c.b16 %v321, %v320
        %v336 = vpack.c.b16 %v323, %v322
        %v337 = vpack.c.b16 %v325, %v324
        %v338 = vpack.c.b16 %v327, %v326
        %v339 = vpack.c.b16 %v329, %v328
        %v340 = vpack.c.b16 %v331, %v330
        %v341 = vpack.c.b16 %v333, %v332
        %350 = vmatprep.subr.bf16.mxu0 0
        %351 = vmatpush1.bf16.msra.mxu0 %v334
        %352 = vmatprep.subr.bf16.mxu0 0
        %353 = vmatpush1.bf16.msra.mxu0 %v335
        %354 = vmatprep.subr.bf16.mxu0 0
        %355 = vmatpush1.bf16.msra.mxu0 %v336
        %356 = vmatprep.subr.bf16.mxu0 0
        %357 = vmatpush1.bf16.msra.mxu0 %v337
        %358 = vmatprep.subr.bf16.mxu0 0
        %359 = vmatpush1.bf16.msra.mxu0 %v338
        %360 = vmatprep.subr.bf16.mxu0 0
        %361 = vmatpush1.bf16.msra.mxu0 %v339
        %362 = vmatprep.subr.bf16.mxu0 0
        %363 = vmatpush1.bf16.msra.mxu0 %v340
        %364 = vmatprep.subr.bf16.mxu0 0
        %365 = vmatpush1.bf16.msra.mxu0 %v341
        %366 = vmatprep.subr.bf16.mxu0 0
        %367 = vmatpush1.bf16.msra.mxu0 0
        %368 = vmatprep.subr.bf16.mxu0 0
        %369 = vmatpush1.bf16.msra.mxu0 0
        %370 = vmatprep.subr.bf16.mxu0 0
        %371 = vmatpush1.bf16.msra.mxu0 0
        %372 = vmatprep.subr.bf16.mxu0 0
        %373 = vmatpush1.bf16.msra.mxu0 0
        %374 = vmatprep.subr.bf16.mxu0 0
        %375 = vmatpush1.bf16.msra.mxu0 0
        %376 = vmatprep.subr.bf16.mxu0 0
        %377 = vmatpush1.bf16.msra.mxu0 0
        %378 = vmatprep.subr.bf16.mxu0 0
        %379 = vmatpush1.bf16.msra.mxu0 0
        %380 = vmatprep.subr.bf16.mxu0 0
        %381 = vmatpush1.bf16.msra.mxu0 0
        %382 = vmatprep.mubr.bf16.mxu0 0
        %383 = vmatmul.mubr.bf16.gmra.mrb[0].mxu0 %v300
        %v384 = vpop.f32.mrb[0].mxu0
        %v385 = vadd.f32 0.0, %v384
        %v386 = vpop.f32.mrb[0].mxu0
        %v387 = vpop.f32.mrb[0].mxu0
        %v388 = vadd.f32 0.0, %v387
        %v389 = vpop.f32.mrb[0].mxu0
        %390 = vdwg.mxu0
        %s391 = scalar_lea.vmem [#allocation5], 64
        %v392 = vld [vmem:[%s391] sm:$0xf]
        %v393 = vld [vmem:[%s391 + $0x4] sm:$0xf]
        %v394 = vld [vmem:[%s391 + $0x8] sm:$0xf]
        %v395 = vld [vmem:[%s391 + $0xc] sm:$0xf]
        %v396 = vld [vmem:[%s391 + $0x10] sm:$0xf]
        %v397 = vld [vmem:[%s391 + $0x14] sm:$0xf]
        %v398 = vld [vmem:[%s391 + $0x18] sm:$0xf]
        %v399 = vld [vmem:[%s391 + $0x1c] sm:$0xf]
        %v400 = vld [vmem:[%s391 + $0x20] sm:$0xf]
        %v401 = vld [vmem:[%s391 + $0x24] sm:$0xf]
        %v402 = vld [vmem:[%s391 + $0x28] sm:$0xf]
        %v403 = vld [vmem:[%s391 + $0x2c] sm:$0xf]
        %v404 = vld [vmem:[%s391 + $0x30] sm:$0xf]
        %v405 = vld [vmem:[%s391 + $0x34] sm:$0xf]
        %v406 = vld [vmem:[%s391 + $0x38] sm:$0xf]
        %v407 = vld [vmem:[%s391 + $0x3c] sm:$0xf]
        %v424 = vunpack.c.l.b16 %v392
        %v425 = vunpack.c.l.b16 %v393
        %v426 = vunpack.c.l.b16 %v394
        %v427 = vunpack.c.l.b16 %v395
        %v428 = vunpack.c.l.b16 %v396
        %v429 = vunpack.c.l.b16 %v397
        %v430 = vunpack.c.l.b16 %v398
        %v431 = vunpack.c.l.b16 %v399
        %v432 = vunpack.c.l.b16 %v400
        %v433 = vunpack.c.l.b16 %v401
        %v434 = vunpack.c.l.b16 %v402
        %v435 = vunpack.c.l.b16 %v403
        %v436 = vunpack.c.l.b16 %v404
        %v437 = vunpack.c.l.b16 %v405
        %v438 = vunpack.c.l.b16 %v406
        %v439 = vunpack.c.l.b16 %v407
        %v440 = vpack.c.b16 %v425, %v424
        %v441 = vpack.c.b16 %v427, %v426
        %v442 = vpack.c.b16 %v429, %v428
        %v443 = vpack.c.b16 %v431, %v430
        %v444 = vpack.c.b16 %v433, %v432
        %v445 = vpack.c.b16 %v435, %v434
        %v446 = vpack.c.b16 %v437, %v436
        %v447 = vpack.c.b16 %v439, %v438
        %456 = vmatprep.subr.bf16.mxu0 0
        %457 = vmatpush1.bf16.msra.mxu0 %v440
        %458 = vmatprep.subr.bf16.mxu0 0
        %459 = vmatpush1.bf16.msra.mxu0 %v441
        %460 = vmatprep.subr.bf16.mxu0 0
        %461 = vmatpush1.bf16.msra.mxu0 %v442
        %462 = vmatprep.subr.bf16.mxu0 0
        %463 = vmatpush1.bf16.msra.mxu0 %v443
        %464 = vmatprep.subr.bf16.mxu0 0
        %465 = vmatpush1.bf16.msra.mxu0 %v444
        %466 = vmatprep.subr.bf16.mxu0 0
        %467 = vmatpush1.bf16.msra.mxu0 %v445
        %468 = vmatprep.subr.bf16.mxu0 0
        %469 = vmatpush1.bf16.msra.mxu0 %v446
        %470 = vmatprep.subr.bf16.mxu0 0
        %471 = vmatpush1.bf16.msra.mxu0 %v447
        %472 = vmatprep.subr.bf16.mxu0 0
        %473 = vmatpush1.bf16.msra.mxu0 0
        %474 = vmatprep.subr.bf16.mxu0 0
        %475 = vmatpush1.bf16.msra.mxu0 0
        %476 = vmatprep.subr.bf16.mxu0 0
        %477 = vmatpush1.bf16.msra.mxu0 0
        %478 = vmatprep.subr.bf16.mxu0 0
        %479 = vmatpush1.bf16.msra.mxu0 0
        %480 = vmatprep.subr.bf16.mxu0 0
        %481 = vmatpush1.bf16.msra.mxu0 0
        %482 = vmatprep.subr.bf16.mxu0 0
        %483 = vmatpush1.bf16.msra.mxu0 0
        %484 = vmatprep.subr.bf16.mxu0 0
        %485 = vmatpush1.bf16.msra.mxu0 0
        %486 = vmatprep.subr.bf16.mxu0 0
        %487 = vmatpush1.bf16.msra.mxu0 0
        %488 = vmatprep.mubr.bf16.mxu0 0
        %489 = vmatmul.mubr.bf16.gmra.mrb[0].mxu0 %v300
        %v490 = vpop.f32.mrb[0].mxu0
        %v491 = vadd.f32 0.0, %v490
        %v492 = vpop.f32.mrb[0].mxu0
        %v493 = vpop.f32.mrb[0].mxu0
        %v494 = vadd.f32 0.0, %v493
        %v495 = vpop.f32.mrb[0].mxu0
        %496 = vdwg.mxu0
        %s497 = scalar_lea.vmem [#allocation5], 128
        %v498 = vld [vmem:[%s497] sm:$0xf]
        %v499 = vld [vmem:[%s497 + $0x4] sm:$0xf]
        %v500 = vld [vmem:[%s497 + $0x8] sm:$0xf]
        %v501 = vld [vmem:[%s497 + $0xc] sm:$0xf]
        %v502 = vld [vmem:[%s497 + $0x10] sm:$0xf]
        %v503 = vld [vmem:[%s497 + $0x14] sm:$0xf]
        %v504 = vld [vmem:[%s497 + $0x18] sm:$0xf]
        %v505 = vld [vmem:[%s497 + $0x1c] sm:$0xf]
        %v506 = vld [vmem:[%s497 + $0x20] sm:$0xf]
        %v507 = vld [vmem:[%s497 + $0x24] sm:$0xf]
        %v508 = vld [vmem:[%s497 + $0x28] sm:$0xf]
        %v509 = vld [vmem:[%s497 + $0x2c] sm:$0xf]
        %v510 = vld [vmem:[%s497 + $0x30] sm:$0xf]
        %v511 = vld [vmem:[%s497 + $0x34] sm:$0xf]
        %v512 = vld [vmem:[%s497 + $0x38] sm:$0xf]
        %v513 = vld [vmem:[%s497 + $0x3c] sm:$0xf]
        %v530 = vunpack.c.l.b16 %v498
        %v531 = vunpack.c.l.b16 %v499
        %v532 = vunpack.c.l.b16 %v500
        %v533 = vunpack.c.l.b16 %v501
        %v534 = vunpack.c.l.b16 %v502
        %v535 = vunpack.c.l.b16 %v503
        %v536 = vunpack.c.l.b16 %v504
        %v537 = vunpack.c.l.b16 %v505
        %v538 = vunpack.c.l.b16 %v506
        %v539 = vunpack.c.l.b16 %v507
        %v540 = vunpack.c.l.b16 %v508
        %v541 = vunpack.c.l.b16 %v509
        %v542 = vunpack.c.l.b16 %v510
        %v543 = vunpack.c.l.b16 %v511
        %v544 = vunpack.c.l.b16 %v512
        %v545 = vunpack.c.l.b16 %v513
        %v546 = vpack.c.b16 %v531, %v530
        %v547 = vpack.c.b16 %v533, %v532
        %v548 = vpack.c.b16 %v535, %v534
        %v549 = vpack.c.b16 %v537, %v536
        %v550 = vpack.c.b16 %v539, %v538
        %v551 = vpack.c.b16 %v541, %v540
        %v552 = vpack.c.b16 %v543, %v542
        %v553 = vpack.c.b16 %v545, %v544
        %562 = vmatprep.subr.bf16.mxu0 0
        %563 = vmatpush1.bf16.msra.mxu0 %v546
        %564 = vmatprep.subr.bf16.mxu0 0
        %565 = vmatpush1.bf16.msra.mxu0 %v547
        %566 = vmatprep.subr.bf16.mxu0 0
        %567 = vmatpush1.bf16.msra.mxu0 %v548
        %568 = vmatprep.subr.bf16.mxu0 0
        %569 = vmatpush1.bf16.msra.mxu0 %v549
        %570 = vmatprep.subr.bf16.mxu0 0
        %571 = vmatpush1.bf16.msra.mxu0 %v550
        %572 = vmatprep.subr.bf16.mxu0 0
        %573 = vmatpush1.bf16.msra.mxu0 %v551
        %574 = vmatprep.subr.bf16.mxu0 0
        %575 = vmatpush1.bf16.msra.mxu0 %v552
        %576 = vmatprep.subr.bf16.mxu0 0
        %577 = vmatpush1.bf16.msra.mxu0 %v553
        %578 = vmatprep.subr.bf16.mxu0 0
        %579 = vmatpush1.bf16.msra.mxu0 0
        %580 = vmatprep.subr.bf16.mxu0 0
        %581 = vmatpush1.bf16.msra.mxu0 0
        %582 = vmatprep.subr.bf16.mxu0 0
        %583 = vmatpush1.bf16.msra.mxu0 0
        %584 = vmatprep.subr.bf16.mxu0 0
        %585 = vmatpush1.bf16.msra.mxu0 0
        %586 = vmatprep.subr.bf16.mxu0 0
        %587 = vmatpush1.bf16.msra.mxu0 0
        %588 = vmatprep.subr.bf16.mxu0 0
        %589 = vmatpush1.bf16.msra.mxu0 0
        %590 = vmatprep.subr.bf16.mxu0 0
        %591 = vmatpush1.bf16.msra.mxu0 0
        %592 = vmatprep.subr.bf16.mxu0 0
        %593 = vmatpush1.bf16.msra.mxu0 0
        %594 = vmatprep.mubr.bf16.mxu0 0
        %595 = vmatmul.mubr.bf16.gmra.mrb[0].mxu0 %v300
        %v596 = vpop.f32.mrb[0].mxu0
        %v597 = vadd.f32 0.0, %v596
        %v598 = vpop.f32.mrb[0].mxu0
        %v599 = vpop.f32.mrb[0].mxu0
        %v600 = vadd.f32 0.0, %v599
        %v601 = vpop.f32.mrb[0].mxu0
        %602 = vdwg.mxu0
        %603 = vmatprep.subr.bf16.mxu0 0
        %604 = vmatpush1.bf16.msra.mxu0 %v334
        %605 = vmatprep.subr.bf16.mxu0 0
        %606 = vmatpush1.bf16.msra.mxu0 %v335
        %607 = vmatprep.subr.bf16.mxu0 0
        %608 = vmatpush1.bf16.msra.mxu0 %v336
        %609 = vmatprep.subr.bf16.mxu0 0
        %610 = vmatpush1.bf16.msra.mxu0 %v337
        %611 = vmatprep.subr.bf16.mxu0 0
        %612 = vmatpush1.bf16.msra.mxu0 %v338
        %613 = vmatprep.subr.bf16.mxu0 0
        %614 = vmatpush1.bf16.msra.mxu0 %v339
        %615 = vmatprep.subr.bf16.mxu0 0
        %616 = vmatpush1.bf16.msra.mxu0 %v340
        %617 = vmatprep.subr.bf16.mxu0 0
        %618 = vmatpush1.bf16.msra.mxu0 %v341
        %619 = vmatprep.subr.bf16.mxu0 0
        %620 = vmatpush1.bf16.msra.mxu0 0
        %621 = vmatprep.subr.bf16.mxu0 0
        %622 = vmatpush1.bf16.msra.mxu0 0
        %623 = vmatprep.subr.bf16.mxu0 0
        %624 = vmatpush1.bf16.msra.mxu0 0
        %625 = vmatprep.subr.bf16.mxu0 0
        %626 = vmatpush1.bf16.msra.mxu0 0
        %627 = vmatprep.subr.bf16.mxu0 0
        %628 = vmatpush1.bf16.msra.mxu0 0
        %629 = vmatprep.subr.bf16.mxu0 0
        %630 = vmatpush1.bf16.msra.mxu0 0
        %631 = vmatprep.subr.bf16.mxu0 0
        %632 = vmatpush1.bf16.msra.mxu0 0
        %633 = vmatprep.subr.bf16.mxu0 0
        %634 = vmatpush1.bf16.msra.mxu0 0
        %635 = vmatprep.mubr.bf16.mxu0 0
        %636 = vmatmul.mubr.bf16.gmra.mrb[0].mxu0 %v279
        %v637 = vpop.f32.mrb[0].mxu0
        %v638 = vadd.f32 0.0, %v637
        %v639 = vpop.f32.mrb[0].mxu0
        %v640 = vpop.f32.mrb[0].mxu0
        %v641 = vpop.f32.mrb[0].mxu0
        %642 = vdwg.mxu0
        %v645 = vunpack.c.l.s4 1966171168
        %v646 = vunpack.c.0.s8 %v645
        %v647 = vlaneseq
        %v648 = vshrl.u32 %v647, 7
        %v649 = vsub.s32 %v646, %v648
        %v650 = vrot.slane %v279, %v649
        %v652 = vunpack.c.l.s4 1966171168
        %v653 = vunpack.c.0.s8 %v652
        %v654 = vlaneseq
        %v655 = vshrl.u32 %v654, 7
        %v656 = vsub.s32 %v653, %v655
        %v657 = vrot.slane %v650, %v656
        %v659 = vshrl.u32 %v657, 16
        %662 = vmatprep.subr.bf16.mxu0 0
        %663 = vmatpush1.bf16.msra.mxu0 %v546
        %664 = vmatprep.subr.bf16.mxu0 0
        %665 = vmatpush1.bf16.msra.mxu0 %v547
        %666 = vmatprep.subr.bf16.mxu0 0
        %667 = vmatpush1.bf16.msra.mxu0 %v548
        %668 = vmatprep.subr.bf16.mxu0 0
        %669 = vmatpush1.bf16.msra.mxu0 %v549
        %670 = vmatprep.subr.bf16.mxu0 0
        %671 = vmatpush1.bf16.msra.mxu0 %v550
        %672 = vmatprep.subr.bf16.mxu0 0
        %673 = vmatpush1.bf16.msra.mxu0 %v551
        %674 = vmatprep.subr.bf16.mxu0 0
        %675 = vmatpush1.bf16.msra.mxu0 %v552
        %676 = vmatprep.subr.bf16.mxu0 0
        %677 = vmatpush1.bf16.msra.mxu0 %v553
        %678 = vmatprep.subr.bf16.mxu0 0
        %679 = vmatpush1.bf16.msra.mxu0 0
        %680 = vmatprep.subr.bf16.mxu0 0
        %681 = vmatpush1.bf16.msra.mxu0 0
        %682 = vmatprep.subr.bf16.mxu0 0
        %683 = vmatpush1.bf16.msra.mxu0 0
        %684 = vmatprep.subr.bf16.mxu0 0
        %685 = vmatpush1.bf16.msra.mxu0 0
        %686 = vmatprep.subr.bf16.mxu0 0
        %687 = vmatpush1.bf16.msra.mxu0 0
        %688 = vmatprep.subr.bf16.mxu0 0
        %689 = vmatpush1.bf16.msra.mxu0 0
        %690 = vmatprep.subr.bf16.mxu0 0
        %691 = vmatpush1.bf16.msra.mxu0 0
        %692 = vmatprep.subr.bf16.mxu0 0
        %693 = vmatpush1.bf16.msra.mxu0 0
        %694 = vmatprep.mubr.bf16.mxu0 0
        %695 = vmatmul.mubr.bf16.gmra.mrb[0].mxu0 %v659
        %v696 = vpop.f32.mrb[0].mxu0
        %v697 = vadd.f32 0.0, %v696
        %v698 = vpop.f32.mrb[0].mxu0
        %v699 = vpop.f32.mrb[0].mxu0
        %v700 = vpop.f32.mrb[0].mxu0
        %701 = vdwg.mxu0
        %v702 = vlaneseq
        %v703 = vshrl.u32 %v702, 7
        %v704 = vadd.s32 %v703, 8
        %vm705 = vcmp.eq.s32.totalorder %v703, 0
        %vm706 = vcmp.eq.s32.totalorder %v704, 0
        %v707 = vrot.slane %v385, 7
        %v708 = vrot.slane %v388, 7
        %vm709 = vcmp.lt.s32.totalorder %v703, 1
        %v710 = vsel %vm709, %v707, %v708
        %v711 = vsel %vm709, %v708, %v707
        %v712 = vlaneseq
        %v713 = vshrl.u32 %v712, 7
        %v714 = vsub.s32 0, %v713
        %v715 = vrot.slane %v638, %v714
        %v716 = vsel %vm705, %v715, %v711
        %v717 = vsel %vm706, %v715, %v710
        %vm718 = vcmp.eq.s32.totalorder %v703, 15
        %vm719 = vcmp.eq.s32.totalorder %v704, 15
        %v720 = vrot.slane %v597, 1
        %v721 = vrot.slane %v600, 1
        %vm722 = vcmp.lt.s32.totalorder %v703, 7
        %v723 = vsel %vm722, %v720, %v721
        %v724 = vsel %vm722, %v721, %v720
        %v725 = vlaneseq
        %v726 = vshrl.u32 %v725, 7
        %v727 = vsub.s32 0, %v726
        %v728 = vrot.slane %v697, %v727
        %v729 = vsel %vm718, %v728, %v723
        %v730 = vsel %vm719, %v728, %v724
        %v731 = vadd.f32 %v716, %v491
        %v732 = vadd.f32 %v717, %v494
        %v733 = vadd.f32 %v731, %v729
        %v734 = vadd.f32 %v732, %v730
        %v735 = vld [vmem:[%s3] sm:$0x1]
        %v737 = vlaneseq
        %v738 = vshrl.u32 %v737, 7
        %v739 = vsub.s32 0, %v738
        %v740 = vrot.slane %v735, %v739
        %v742 = vadd.f32 %v733, %v740
        %v743 = vadd.f32 %v734, %v740
        %v744 = vunpack.c.l.bf16 %v277
        %v745 = vunpack.c.l.bf16 %v278
        %v746 = vadd.f32 %v742, %v744
        %v747 = vadd.f32 %v743, %v745
        %748 = vst [vmem:[%s267] sm:$0xff] %v746
        %749 = vst [vmem:[%s267 + $0x8] sm:$0xff] %v747
        %s750 = sand.u32 %s142, 1
        %s751 = scalar_lea.sflag [#allocation4], %s750
        %s752 = sand.u32 %s142, 1
        %s753 = smul.addr %s752, 16
        %s754 = scalar_lea.vmem [#allocation7], %s753
        // Predicated region
        $region45: #{tpu_custom_call.1} parent=35 // pred_check
          %p755 = pneg %p152
        $region46: #{tpu_custom_call.1} parent=35 // pred_check_branch
          %757 = sbr.rel (%p755) target = $region48
        $region47: #{tpu_custom_call.1} parent=35 // pred_region
          %s758 = smul.u32 2, %s27
          %s760 = ssub.s32 256, 256
          %761 = vsyncadd %s751, %s760
          %s762 = smul.addr %s26, 2
          %s763 = sadd.s32 %s758, %s762
          %s764 = smul.addr %s763, 128
          %s765 = scalar_lea.hbm %s4, %s764
          %s766 = sshll.u32 %s754, 4
          %s767 = int_to_ptr.vmem [resolvable:$true] %s766
          %772 = dma.vmem_to_hbm [thread:$0]  %s767, 256, %s765, %s751, 128, 128, 8
        $region48: #{tpu_custom_call.1} parent=35 // pred_fallthru
          _
      $region36: #{tpu_custom_call.1} parent=5 // pred_fallthru
        _
      %p773 = scmp.le.s32.totalorder 2, %s17
      // Predicated region
      $region49: #{tpu_custom_call.1} parent=5 // pred_check
        %p774 = pneg %p773
      $region50: #{tpu_custom_call.1} parent=5 // pred_check_branch
        %776 = sbr.rel (%p774) target = $region52
      $region51: #{tpu_custom_call.1} parent=5 // pred_region
        %s777 = ssub.s32 %s17, 2
        // Predicated region
        $region53: #{tpu_custom_call.1} parent=51 // pred_check
          %p778 = pneg %p158
        $region54: #{tpu_custom_call.1} parent=51 // pred_check_branch
          %780 = sbr.rel (%p778) target = $region56
        $region55: #{tpu_custom_call.1} parent=51 // pred_region
          %s781 = sand.u32 %s143, 1
          %s782 = scalar_lea.sflag [#allocation4], %s781
          %s783 = sand.u32 %s143, 1
          %s784 = smul.addr %s783, 16
          %s785 = scalar_lea.vmem [#allocation7], %s784
          %786 = dma.done %s782, 256
        $region56: #{tpu_custom_call.1} parent=51 // pred_fallthru
          _
      $region52: #{tpu_custom_call.1} parent=5 // pred_fallthru
        _
    $region6: #{tpu_custom_call.1} parent=1 // loop_footer
      %s21 = sadd.s32 1, %s17
    $region7: #{tpu_custom_call.1} parent=1 // loop_footer_branch
      %16 = sbr.rel target = $region3
    $region8: #{tpu_custom_call.1} parent=1 // loop_exit
      _
    %787 = vsyncpa [#allocation3], 1
    %s788 = scalar_lea.sflag [#allocation3], 1
    %789 = vsyncpa %s788, 1
    %790 = vsyncpa [#allocation6], 1
    %791 = vsyncpa [#allocation4], 1
    %s792 = scalar_lea.sflag [#allocation4], 1
    %793 = vsyncpa %s792, 1

</llo_original>
